<compile_context>
chip_gen: v7x
topology: tpu7x:2x2x1
jax: 0.10.0
libtpu: 0.0.40
codegen_flags: <defaults>
</compile_context>

<pallas_src>
from functools import partial

import jax
import jax.numpy as jnp
from jax.experimental import pallas as pl
from jax.experimental.pallas import tpu as pltpu

EPS = 1e-5


# ----------------------------------------------------------------------------------
# Weight preprocessing: express the 3x3 'same' conv along W as a block-banded matmul.
# ----------------------------------------------------------------------------------
def _band_conv_weights(w_hwio, width):
    """(3,3,Ci,Co) HWIO weights -> (3, width*Ci, width*Co) block-banded matrices so
    that, per kernel row dy, the whole conv row is one matmul of the (H, width*Ci)
    activation rows (shifted by dy-1) against band[dy]."""
    kh, kw, ci, co = w_hwio.shape
    xi = jnp.arange(width)[:, None]
    xo = jnp.arange(width)[None, :]
    dx = xi - xo + (kw // 2)                       # which tap column connects xi -> xo
    valid = (dx >= 0) & (dx < kw)
    taps = jnp.where(valid, dx, 0)
    blk = w_hwio[:, taps, :, :] * valid[None, :, :, None, None].astype(w_hwio.dtype)
    # (kh, xi, xo, ci, co) -> (kh, xi, ci, xo, co) -> (kh, width*ci, width*co)
    return blk.transpose(0, 1, 3, 2, 4).reshape(kh, width * ci, width * co)


def _diag_conv_weights(w_1x1, width):
    """(Ci,Co) 1x1 conv -> (width*Ci, width*Co) block-diagonal matrix."""
    ci, co = w_1x1.shape
    eye = jnp.eye(width, dtype=w_1x1.dtype)
    return (eye[:, None, :, None] * w_1x1[None, :, None, :]).reshape(width * ci, width * co)


def _invariant_spec(block_shape, index_map):
    """BlockSpec for a grid-invariant operand, single-buffered (halves weight-slab
    VMEM; matters on v7x's 64 MiB). Falls back to a plain BlockSpec if this JAX
    build does not accept pipeline_mode."""
    try:
        return pl.BlockSpec(block_shape, index_map, pipeline_mode=pl.Buffered(1))
    except (AttributeError, TypeError, ValueError):
        return pl.BlockSpec(block_shape, index_map)


def _pick_images_per_block(n, h, target_rows=256):
    """Largest divisor B of N such that B*H stays <= ~256 matmul rows per step."""
    best = 1
    for b in range(1, n + 1):
        if n % b == 0 and b * h <= max(target_rows, h):
            best = b
    return best


# ----------------------------------------------------------------------------------
# Kernel A: BN1(affine)+ReLU -> fused 3x3 conv1 + 1x1 shortcut (one matmul),
#           plus BN2 partial sums.  One block of B images per grid step.
# ----------------------------------------------------------------------------------
def _bn1_conv1_shortcut_kernel(x_ref, s1_ref, t1_ref, w1_ref, y1_ref, sc_ref, st_ref):
    B, H, WC = x_ref.shape
    WP = y1_ref.shape[2]

    # BN1 (pre-folded per-channel affine, tiled along W) + ReLU, f32 on the VPU.
    h1 = jnp.maximum(x_ref[...] * s1_ref[...] + t1_ref[...], 0.0)          # (B, H, WC)

    # 'same' zero padding along H: only two border rows, then ONE cast to MXU dtype.
    zrow = jnp.zeros((B, 1, WC), h1.dtype)
    hp = jnp.concatenate([zrow, h1, zrow], axis=1).astype(w1_ref.dtype)    # (B, H+2, WC)

    # Fused-tap conv: concatenate the three dy-shifted row slabs along the feature
    # axis -> single (B*H, 3*WC) @ (3*WC, 2*WP) MXU matmul.  Output columns
    # [0:WP] = conv1, [WP:2*WP] = 1x1 shortcut (folded into the center band).
    slab = jnp.concatenate([hp[:, 0:H], hp[:, 1:H + 1], hp[:, 2:H + 2]], axis=-1)
    acc = jnp.dot(slab.reshape(B * H, 3 * WC), w1_ref[...],
                  preferred_element_type=jnp.float32)                      # (B*H, 2*WP)

    y1 = acc[:, :WP]                                                       # f32 conv1
    y1_ref[...] = y1.reshape(B, H, WP).astype(y1_ref.dtype)
    sc_ref[...] = acc[:, WP:].reshape(B, H, WP).astype(sc_ref.dtype)

    # Per-block partial sums for BN2 batch statistics (one-pass sum / sum-of-squares
    # from the f32 accumulator; the tiny (NB, W) reduction happens in the wrapper).
    st_ref[0] = jnp.concatenate(
        [jnp.sum(y1, axis=0, keepdims=True),
         jnp.sum(y1 * y1, axis=0, keepdims=True)], axis=0).astype(st_ref.dtype)


# ----------------------------------------------------------------------------------
# Kernel B: BN2(affine)+ReLU -> fused 3x3 conv2 (one matmul) -> + shortcut.
# ----------------------------------------------------------------------------------
def _bn2_conv2_add_kernel(y1_ref, sc_ref, s2_ref, t2_ref, w2_ref, out_ref):
    B, H, WP = y1_ref.shape

    # BN2 affine + ReLU in f32 (intermediates may arrive in bf16).
    h2 = jnp.maximum(y1_ref[...].astype(jnp.float32) * s2_ref[...] + t2_ref[...], 0.0)
    zrow = jnp.zeros((B, 1, WP), h2.dtype)
    hp = jnp.concatenate([zrow, h2, zrow], axis=1).astype(w2_ref.dtype)    # (B, H+2, WP)

    slab = jnp.concatenate([hp[:, 0:H], hp[:, 1:H + 1], hp[:, 2:H + 2]], axis=-1)
    acc = jnp.dot(slab.reshape(B * H, 3 * WP), w2_ref[...],
                  preferred_element_type=jnp.float32).reshape(B, H, WP)

    out_ref[...] = (acc + sc_ref[...].astype(jnp.float32)).astype(out_ref.dtype)


# ----------------------------------------------------------------------------------
# Wrapper (NHWC end-to-end).
# ----------------------------------------------------------------------------------
@partial(jax.jit, static_argnames=("mxu_dtype",))
def preact_block(x, params, *, mxu_dtype=jnp.bfloat16):
    """x: (N, H, W, Cin) float32 NHWC. Returns (N, H, W, P) float32 NHWC."""
    g1, b1, w1, g2, b2, w2, ws = (params[k] for k in
                                  ("g1", "b1", "w1", "g2", "b2", "w2", "ws"))
    N, H, W, Cin = x.shape
    P = w1.shape[-1]
    WC, WP = W * Cin, W * P

    B = _pick_images_per_block(N, H)             # images per grid step (M = B*H rows)
    NB = N // B

    # --- BN1 batch stats (biased variance), folded into a per-channel affine -------
    mean1 = jnp.mean(x, axis=(0, 1, 2))
    var1 = jnp.maximum(jnp.mean(jnp.square(x), axis=(0, 1, 2)) - jnp.square(mean1), 0.0)
    s1c = g1 * jax.lax.rsqrt(var1 + EPS)
    t1c = b1 - mean1 * s1c
    s1 = jnp.tile(s1c, W).reshape(1, WC)
    t1 = jnp.tile(t1c, W).reshape(1, WC)

    # --- fused weight slabs ----------------------------------------------------------
    band1 = _band_conv_weights(w1, W).reshape(3 * WC, WP)          # conv1, K = 3*WC
    sc_diag = _diag_conv_weights(ws, W)                            # (WC, WP)
    zero = jnp.zeros((WC, WP), sc_diag.dtype)
    sc_col = jnp.concatenate([zero, sc_diag, zero], axis=0)        # shortcut, center band
    w1_fused = jnp.concatenate([band1, sc_col], axis=1).astype(mxu_dtype)  # (3*WC, 2*WP)
    w2_fused = _band_conv_weights(w2, W).reshape(3 * WP, WP).astype(mxu_dtype)

    x2 = x.reshape(N, H, WC)                                       # lane-dense slab
    inter_dtype = mxu_dtype                                        # bf16 intermediates on fast path

    y1, sc, st = pl.pallas_call(
        _bn1_conv1_shortcut_kernel,
        grid=(NB,),
        in_specs=[
            pl.BlockSpec((B, H, WC), lambda g: (g, 0, 0)),
            _invariant_spec((1, WC), lambda g: (0, 0)),
            _invariant_spec((1, WC), lambda g: (0, 0)),
            _invariant_spec((3 * WC, 2 * WP), lambda g: (0, 0)),
        ],
        out_specs=(
            pl.BlockSpec((B, H, WP), lambda g: (g, 0, 0)),
            pl.BlockSpec((B, H, WP), lambda g: (g, 0, 0)),
            pl.BlockSpec((1, 2, WP), lambda g: (g, 0, 0)),
        ),
        out_shape=(
            jax.ShapeDtypeStruct((N, H, WP), inter_dtype),   # conv1 output
            jax.ShapeDtypeStruct((N, H, WP), inter_dtype),   # shortcut
            jax.ShapeDtypeStruct((NB, 2, WP), jnp.float32),  # BN2 partial sums (f32)
        ),
        compiler_params=pltpu.CompilerParams(dimension_semantics=("parallel",)),
    )(x2, s1, t1, w1_fused)

    # --- BN2 batch stats from per-block partial sums (no extra HBM pass over y1) ----
    cnt = N * H * W
    mean2 = jnp.sum(st[:, 0, :].reshape(NB, W, P), axis=(0, 1)) / cnt
    var2 = jnp.maximum(jnp.sum(st[:, 1, :].reshape(NB, W, P), axis=(0, 1)) / cnt
                       - jnp.square(mean2), 0.0)
    s2c = g2 * jax.lax.rsqrt(var2 + EPS)
    t2c = b2 - mean2 * s2c
    s2 = jnp.tile(s2c, W).reshape(1, WP)
    t2 = jnp.tile(t2c, W).reshape(1, WP)

    out = pl.pallas_call(
        _bn2_conv2_add_kernel,
        grid=(NB,),
        in_specs=[
            pl.BlockSpec((B, H, WP), lambda g: (g, 0, 0)),
            pl.BlockSpec((B, H, WP), lambda g: (g, 0, 0)),
            _invariant_spec((1, WP), lambda g: (0, 0)),
            _invariant_spec((1, WP), lambda g: (0, 0)),
            _invariant_spec((3 * WP, WP), lambda g: (0, 0)),
        ],
        out_specs=pl.BlockSpec((B, H, WP), lambda g: (g, 0, 0)),
        out_shape=jax.ShapeDtypeStruct((N, H, WP), jnp.float32),
        compiler_params=pltpu.CompilerParams(dimension_semantics=("parallel",)),
    )(y1, sc, s2, t2, w2_fused)

    return out.reshape(N, H, W, P)


def preact_block_nchw(x_nchw, params, *, mxu_dtype=jnp.bfloat16):
    """PyTorch-layout (NCHW) convenience wrapper. Prefer the NHWC entry point: the
    two XLA transposes here each add a full extra HBM round trip."""
    out = preact_block(jnp.transpose(x_nchw, (0, 2, 3, 1)), params, mxu_dtype=mxu_dtype)
    return jnp.transpose(out, (0, 3, 1, 2))


# ----------------------------------------------------------------------------------
# Pure-JAX reference (lax.conv, f32 HIGHEST), same math, for verification.
# ----------------------------------------------------------------------------------
def preact_block_reference(x, params):
    g1, b1, w1, g2, b2, w2, ws = (params[k] for k in
                                  ("g1", "b1", "w1", "g2", "b2", "w2", "ws"))

    def bn(y, g, b):
        m = jnp.mean(y, axis=(0, 1, 2), keepdims=True)
        v = jnp.mean(jnp.square(y - m), axis=(0, 1, 2), keepdims=True)
        return (y - m) * jax.lax.rsqrt(v + EPS) * g.reshape(1, 1, 1, -1) + b.reshape(1, 1, 1, -1)

    h = jax.nn.relu(bn(x, g1, b1))
    sc = jnp.einsum("nhwc,cp->nhwp", h, ws, precision=jax.lax.Precision.HIGHEST)
    c1 = jax.lax.conv_general_dilated(h, w1, (1, 1), "SAME",
                                      dimension_numbers=("NHWC", "HWIO", "NHWC"),
                                      precision=jax.lax.Precision.HIGHEST)
    h2 = jax.nn.relu(bn(c1, g2, b2))
    c2 = jax.lax.conv_general_dilated(h2, w2, (1, 1), "SAME",
                                      dimension_numbers=("NHWC", "HWIO", "NHWC"),
                                      precision=jax.lax.Precision.HIGHEST)
    return c2 + sc


if __name__ == "__main__":
    # PreActBlock(in_planes=4, planes=8, stride=1): in_planes != planes -> 1x1 shortcut.
    N, Cin, P, H, W = 2, 4, 8, 16, 16

    key = jax.random.PRNGKey(0)
    k = jax.random.split(key, 8)
    # NHWC end-to-end (layout choice only; math identical to the NCHW PyTorch module).
    x = jax.random.normal(k[0], (N, H, W, Cin), jnp.float32)

    params = {
        # conv weights stored HWIO (== PyTorch OIHW (P,Cin,3,3) transposed to (3,3,Cin,P))
        "w1": jax.random.normal(k[1], (3, 3, Cin, P), jnp.float32) * 0.1,
        "w2": jax.random.normal(k[2], (3, 3, P, P), jnp.float32) * 0.1,
        "ws": jax.random.normal(k[3], (Cin, P), jnp.float32) * 0.1,   # 1x1 shortcut conv
        "g1": 1.0 + 0.1 * jax.random.normal(k[4], (Cin,), jnp.float32),
        "b1": 0.1 * jax.random.normal(k[5], (Cin,), jnp.float32),
        "g2": 1.0 + 0.1 * jax.random.normal(k[6], (P,), jnp.float32),
        "b2": 0.1 * jax.random.normal(k[7], (P,), jnp.float32),
    }

    ref = jax.block_until_ready(preact_block_reference(x, params))

    # f32 MXU operands / f32 intermediates: tight check against the f32 reference.
    out_f32 = jax.block_until_ready(preact_block(x, params, mxu_dtype=jnp.float32))
    assert out_f32.shape == (N, H, W, P), out_f32.shape
    assert bool(jnp.all(jnp.isfinite(out_f32)))
    assert bool(jnp.allclose(out_f32, ref, atol=3e-2, rtol=3e-2)), \
        float(jnp.max(jnp.abs(out_f32 - ref)))

    # bf16 MXU operands + bf16 intermediates (v5e/v6e/v7x fast path, f32 accumulation).
    out_bf16 = jax.block_until_ready(preact_block(x, params))
    assert out_bf16.shape == (N, H, W, P), out_bf16.shape
    assert bool(jnp.all(jnp.isfinite(out_bf16)))
    assert bool(jnp.allclose(out_bf16, ref, atol=8e-2, rtol=8e-2)), \
        float(jnp.max(jnp.abs(out_bf16 - ref)))

    print("KERNEL_OK")
</pallas_src>

<mosaic_0001>
module attributes {stable_mosaic.version = 11 : i64} {
  func.func @_bn1_conv1_shortcut_kernel(%arg0: i32, %arg1: memref<2x16x64xf32, #tpu.memory_space<vmem>>, %arg2: memref<1x64xf32, #tpu.memory_space<vmem>>, %arg3: memref<1x64xf32, #tpu.memory_space<vmem>>, %arg4: memref<192x256xf32, #tpu.memory_space<vmem>>, %arg5: memref<2x16x128xf32, #tpu.memory_space<vmem>>, %arg6: memref<2x16x128xf32, #tpu.memory_space<vmem>>, %arg7: memref<1x2x128xf32, #tpu.memory_space<vmem>>) attributes {dimension_semantics = [#tpu.dimension_semantics<parallel>], iteration_bounds = array<i64: 1>, scalar_prefetch = 0 : i64, scratch_operands = 0 : i64, tpu.core_type = #tpu.core_type<tc>, window_params = [{transform_indices = @transform_0, window_bounds = array<i64: 2, 16, 64>}, {pipeline_mode = #tpu.pipeline_mode<synchronous>, transform_indices = @transform_1, window_bounds = array<i64: 1, 64>}, {pipeline_mode = #tpu.pipeline_mode<synchronous>, transform_indices = @transform_2, window_bounds = array<i64: 1, 64>}, {pipeline_mode = #tpu.pipeline_mode<synchronous>, transform_indices = @transform_3, window_bounds = array<i64: 192, 256>}, {transform_indices = @transform_4, window_bounds = array<i64: 2, 16, 128>}, {transform_indices = @transform_5, window_bounds = array<i64: 2, 16, 128>}, {transform_indices = @transform_6, window_bounds = array<i64: 1, 2, 128>}]} {
    %c0 = arith.constant 0 : index
    %c0_0 = arith.constant 0 : index
    %c0_1 = arith.constant 0 : index
    %0 = vector.load %arg1[%c0, %c0_0, %c0_1] : memref<2x16x64xf32, #tpu.memory_space<vmem>>, vector<2x16x64xf32>
    %c0_2 = arith.constant 0 : index
    %c0_3 = arith.constant 0 : index
    %1 = vector.load %arg2[%c0_2, %c0_3] : memref<1x64xf32, #tpu.memory_space<vmem>>, vector<1x64xf32>
    %2 = vector.shape_cast %1 : vector<1x64xf32> to vector<1x1x64xf32>
    %3 = vector.broadcast %2 : vector<1x1x64xf32> to vector<2x16x64xf32>
    %4 = arith.mulf %0, %3 : vector<2x16x64xf32>
    %c0_4 = arith.constant 0 : index
    %c0_5 = arith.constant 0 : index
    %5 = vector.load %arg3[%c0_4, %c0_5] : memref<1x64xf32, #tpu.memory_space<vmem>>, vector<1x64xf32>
    %6 = vector.shape_cast %5 : vector<1x64xf32> to vector<1x1x64xf32>
    %7 = vector.broadcast %6 : vector<1x1x64xf32> to vector<2x16x64xf32>
    %8 = arith.addf %4, %7 : vector<2x16x64xf32>
    %cst = arith.constant 0.000000e+00 : f32
    %9 = vector.broadcast %cst : f32 to vector<2x16x64xf32>
    %10 = arith.maximumf %8, %9 : vector<2x16x64xf32>
    %cst_6 = arith.constant 0.000000e+00 : f32
    %11 = vector.broadcast %cst_6 : f32 to vector<2x1x64xf32>
    %12 = tpu.concatenate %11, %10, %11 in 1 : vector<2x1x64xf32>, vector<2x16x64xf32>, vector<2x1x64xf32> -> vector<2x18x64xf32>
    %13 = vector.extract_strided_slice %12 {offsets = [0, 0, 0], sizes = [2, 16, 64], strides = [1, 1, 1]} : vector<2x18x64xf32> to vector<2x16x64xf32>
    %14 = vector.extract_strided_slice %12 {offsets = [0, 1, 0], sizes = [2, 16, 64], strides = [1, 1, 1]} : vector<2x18x64xf32> to vector<2x16x64xf32>
    %15 = vector.extract_strided_slice %12 {offsets = [0, 2, 0], sizes = [2, 16, 64], strides = [1, 1, 1]} : vector<2x18x64xf32> to vector<2x16x64xf32>
    %16 = tpu.concatenate %13, %14, %15 in 2 : vector<2x16x64xf32>, vector<2x16x64xf32>, vector<2x16x64xf32> -> vector<2x16x192xf32>
    %17 = vector.shape_cast %16 : vector<2x16x192xf32> to vector<32x192xf32>
    %c0_7 = arith.constant 0 : index
    %c0_8 = arith.constant 0 : index
    %18 = vector.load %arg4[%c0_7, %c0_8] : memref<192x256xf32, #tpu.memory_space<vmem>>, vector<192x256xf32>
    %cst_9 = arith.constant dense<0.000000e+00> : vector<32x256xf32>
    %19 = tpu.matmul %17, %18, %cst_9 {dimension_numbers = #tpu.dot_dimension_numbers<[1], [0], [0], [1], [0, 0, 1, 1], [], []>} : vector<32x192xf32>, vector<192x256xf32>, vector<32x256xf32> -> vector<32x256xf32>
    %20 = vector.extract_strided_slice %19 {offsets = [0, 0], sizes = [32, 128], strides = [1, 1]} : vector<32x256xf32> to vector<32x128xf32>
    %21 = vector.shape_cast %20 : vector<32x128xf32> to vector<2x16x128xf32>
    %c0_10 = arith.constant 0 : index
    %c0_11 = arith.constant 0 : index
    %c0_12 = arith.constant 0 : index
    %22 = vector.load %arg5[%c0_10, %c0_11, %c0_12] : memref<2x16x128xf32, #tpu.memory_space<vmem>>, vector<2x16x128xf32>
    tpu.vector_store %arg5[%c0_10, %c0_11, %c0_12], %21 {strides = array<i32>} : memref<2x16x128xf32, #tpu.memory_space<vmem>>, vector<2x16x128xf32>,
    %23 = vector.extract_strided_slice %19 {offsets = [0, 128], sizes = [32, 128], strides = [1, 1]} : vector<32x256xf32> to vector<32x128xf32>
    %24 = vector.shape_cast %23 : vector<32x128xf32> to vector<2x16x128xf32>
    %c0_13 = arith.constant 0 : index
    %c0_14 = arith.constant 0 : index
    %c0_15 = arith.constant 0 : index
    %25 = vector.load %arg6[%c0_13, %c0_14, %c0_15] : memref<2x16x128xf32, #tpu.memory_space<vmem>>, vector<2x16x128xf32>
    tpu.vector_store %arg6[%c0_13, %c0_14, %c0_15], %24 {strides = array<i32>} : memref<2x16x128xf32, #tpu.memory_space<vmem>>, vector<2x16x128xf32>,
    %cst_16 = arith.constant dense<0.000000e+00> : vector<128xf32>
    %26 = vector.multi_reduction <add>, %20, %cst_16 [0] : vector<32x128xf32> to vector<128xf32>
    %27 = vector.shape_cast %26 : vector<128xf32> to vector<1x128xf32>
    %28 = arith.mulf %20, %20 : vector<32x128xf32>
    %cst_17 = arith.constant dense<0.000000e+00> : vector<128xf32>
    %29 = vector.multi_reduction <add>, %28, %cst_17 [0] : vector<32x128xf32> to vector<128xf32>
    %30 = vector.shape_cast %29 : vector<128xf32> to vector<1x128xf32>
    %31 = tpu.concatenate %27, %30 in 0 : vector<1x128xf32>, vector<1x128xf32> -> vector<2x128xf32>
    %c0_18 = arith.constant 0 : index
    %c0_19 = arith.constant 0 : index
    %c0_20 = arith.constant 0 : index
    %32 = vector.load %arg7[%c0_18, %c0_19, %c0_20] : memref<1x2x128xf32, #tpu.memory_space<vmem>>, vector<1x2x128xf32>
    %33 = vector.shape_cast %32 : vector<1x2x128xf32> to vector<2x128xf32>
    %34 = vector.shape_cast %31 : vector<2x128xf32> to vector<1x2x128xf32>
    tpu.vector_store %arg7[%c0_18, %c0_19, %c0_20], %34 {strides = array<i32>} : memref<1x2x128xf32, #tpu.memory_space<vmem>>, vector<1x2x128xf32>,
    return
  }
  func.func @transform_0(%arg0: i32) -> (i32, i32, i32) {
    %c0_i32 = arith.constant 0 : i32
    %c0_i32_0 = arith.constant 0 : i32
    %c0_i32_1 = arith.constant 0 : i32
    return %arg0, %c0_i32, %c0_i32_0 : i32, i32, i32
  }
  func.func @transform_1(%arg0: i32) -> (i32, i32) {
    %c0_i32 = arith.constant 0 : i32
    %c0_i32_0 = arith.constant 0 : i32
    %c0_i32_1 = arith.constant 0 : i32
    return %c0_i32, %c0_i32_0 : i32, i32
  }
  func.func @transform_2(%arg0: i32) -> (i32, i32) {
    %c0_i32 = arith.constant 0 : i32
    %c0_i32_0 = arith.constant 0 : i32
    %c0_i32_1 = arith.constant 0 : i32
    return %c0_i32, %c0_i32_0 : i32, i32
  }
  func.func @transform_3(%arg0: i32) -> (i32, i32) {
    %c0_i32 = arith.constant 0 : i32
    %c0_i32_0 = arith.constant 0 : i32
    %c0_i32_1 = arith.constant 0 : i32
    return %c0_i32, %c0_i32_0 : i32, i32
  }
  func.func @transform_4(%arg0: i32) -> (i32, i32, i32) {
    %c0_i32 = arith.constant 0 : i32
    %c0_i32_0 = arith.constant 0 : i32
    %c0_i32_1 = arith.constant 0 : i32
    return %arg0, %c0_i32, %c0_i32_0 : i32, i32, i32
  }
  func.func @transform_5(%arg0: i32) -> (i32, i32, i32) {
    %c0_i32 = arith.constant 0 : i32
    %c0_i32_0 = arith.constant 0 : i32
    %c0_i32_1 = arith.constant 0 : i32
    return %arg0, %c0_i32, %c0_i32_0 : i32, i32, i32
  }
  func.func @transform_6(%arg0: i32) -> (i32, i32, i32) {
    %c0_i32 = arith.constant 0 : i32
    %c0_i32_0 = arith.constant 0 : i32
    %c0_i32_1 = arith.constant 0 : i32
    return %arg0, %c0_i32, %c0_i32_0 : i32, i32, i32
  }
}

module attributes {stable_mosaic.version = 11 : i64} {
  func.func @_bn2_conv2_add_kernel(%arg0: i32, %arg1: memref<2x16x128xf32, #tpu.memory_space<vmem>>, %arg2: memref<2x16x128xf32, #tpu.memory_space<vmem>>, %arg3: memref<1x128xf32, #tpu.memory_space<vmem>>, %arg4: memref<1x128xf32, #tpu.memory_space<vmem>>, %arg5: memref<384x128xf32, #tpu.memory_space<vmem>>, %arg6: memref<2x16x128xf32, #tpu.memory_space<vmem>>) attributes {dimension_semantics = [#tpu.dimension_semantics<parallel>], iteration_bounds = array<i64: 1>, scalar_prefetch = 0 : i64, scratch_operands = 0 : i64, tpu.core_type = #tpu.core_type<tc>, window_params = [{transform_indices = @transform_0, window_bounds = array<i64: 2, 16, 128>}, {transform_indices = @transform_1, window_bounds = array<i64: 2, 16, 128>}, {pipeline_mode = #tpu.pipeline_mode<synchronous>, transform_indices = @transform_2, window_bounds = array<i64: 1, 128>}, {pipeline_mode = #tpu.pipeline_mode<synchronous>, transform_indices = @transform_3, window_bounds = array<i64: 1, 128>}, {pipeline_mode = #tpu.pipeline_mode<synchronous>, transform_indices = @transform_4, window_bounds = array<i64: 384, 128>}, {transform_indices = @transform_5, window_bounds = array<i64: 2, 16, 128>}]} {
    %c0 = arith.constant 0 : index
    %c0_0 = arith.constant 0 : index
    %c0_1 = arith.constant 0 : index
    %0 = vector.load %arg1[%c0, %c0_0, %c0_1] : memref<2x16x128xf32, #tpu.memory_space<vmem>>, vector<2x16x128xf32>
    %c0_2 = arith.constant 0 : index
    %c0_3 = arith.constant 0 : index
    %1 = vector.load %arg3[%c0_2, %c0_3] : memref<1x128xf32, #tpu.memory_space<vmem>>, vector<1x128xf32>
    %2 = vector.shape_cast %1 : vector<1x128xf32> to vector<1x1x128xf32>
    %3 = vector.broadcast %2 : vector<1x1x128xf32> to vector<2x16x128xf32>
    %4 = arith.mulf %0, %3 : vector<2x16x128xf32>
    %c0_4 = arith.constant 0 : index
    %c0_5 = arith.constant 0 : index
    %5 = vector.load %arg4[%c0_4, %c0_5] : memref<1x128xf32, #tpu.memory_space<vmem>>, vector<1x128xf32>
    %6 = vector.shape_cast %5 : vector<1x128xf32> to vector<1x1x128xf32>
    %7 = vector.broadcast %6 : vector<1x1x128xf32> to vector<2x16x128xf32>
    %8 = arith.addf %4, %7 : vector<2x16x128xf32>
    %cst = arith.constant 0.000000e+00 : f32
    %9 = vector.broadcast %cst : f32 to vector<2x16x128xf32>
    %10 = arith.maximumf %8, %9 : vector<2x16x128xf32>
    %cst_6 = arith.constant 0.000000e+00 : f32
    %11 = vector.broadcast %cst_6 : f32 to vector<2x1x128xf32>
    %12 = tpu.concatenate %11, %10, %11 in 1 : vector<2x1x128xf32>, vector<2x16x128xf32>, vector<2x1x128xf32> -> vector<2x18x128xf32>
    %13 = vector.extract_strided_slice %12 {offsets = [0, 0, 0], sizes = [2, 16, 128], strides = [1, 1, 1]} : vector<2x18x128xf32> to vector<2x16x128xf32>
    %14 = vector.extract_strided_slice %12 {offsets = [0, 1, 0], sizes = [2, 16, 128], strides = [1, 1, 1]} : vector<2x18x128xf32> to vector<2x16x128xf32>
    %15 = vector.extract_strided_slice %12 {offsets = [0, 2, 0], sizes = [2, 16, 128], strides = [1, 1, 1]} : vector<2x18x128xf32> to vector<2x16x128xf32>
    %16 = tpu.concatenate %13, %14, %15 in 2 : vector<2x16x128xf32>, vector<2x16x128xf32>, vector<2x16x128xf32> -> vector<2x16x384xf32>
    %17 = vector.shape_cast %16 : vector<2x16x384xf32> to vector<32x384xf32>
    %c0_7 = arith.constant 0 : index
    %c0_8 = arith.constant 0 : index
    %18 = vector.load %arg5[%c0_7, %c0_8] : memref<384x128xf32, #tpu.memory_space<vmem>>, vector<384x128xf32>
    %cst_9 = arith.constant dense<0.000000e+00> : vector<32x128xf32>
    %19 = tpu.matmul %17, %18, %cst_9 {dimension_numbers = #tpu.dot_dimension_numbers<[1], [0], [0], [1], [0, 0, 1, 1], [], []>} : vector<32x384xf32>, vector<384x128xf32>, vector<32x128xf32> -> vector<32x128xf32>
    %20 = vector.shape_cast %19 : vector<32x128xf32> to vector<2x16x128xf32>
    %c0_10 = arith.constant 0 : index
    %c0_11 = arith.constant 0 : index
    %c0_12 = arith.constant 0 : index
    %21 = vector.load %arg2[%c0_10, %c0_11, %c0_12] : memref<2x16x128xf32, #tpu.memory_space<vmem>>, vector<2x16x128xf32>
    %22 = arith.addf %20, %21 : vector<2x16x128xf32>
    %c0_13 = arith.constant 0 : index
    %c0_14 = arith.constant 0 : index
    %c0_15 = arith.constant 0 : index
    %23 = vector.load %arg6[%c0_13, %c0_14, %c0_15] : memref<2x16x128xf32, #tpu.memory_space<vmem>>, vector<2x16x128xf32>
    tpu.vector_store %arg6[%c0_13, %c0_14, %c0_15], %22 {strides = array<i32>} : memref<2x16x128xf32, #tpu.memory_space<vmem>>, vector<2x16x128xf32>,
    return
  }
  func.func @transform_0(%arg0: i32) -> (i32, i32, i32) {
    %c0_i32 = arith.constant 0 : i32
    %c0_i32_0 = arith.constant 0 : i32
    %c0_i32_1 = arith.constant 0 : i32
    return %arg0, %c0_i32, %c0_i32_0 : i32, i32, i32
  }
  func.func @transform_1(%arg0: i32) -> (i32, i32, i32) {
    %c0_i32 = arith.constant 0 : i32
    %c0_i32_0 = arith.constant 0 : i32
    %c0_i32_1 = arith.constant 0 : i32
    return %arg0, %c0_i32, %c0_i32_0 : i32, i32, i32
  }
  func.func @transform_2(%arg0: i32) -> (i32, i32) {
    %c0_i32 = arith.constant 0 : i32
    %c0_i32_0 = arith.constant 0 : i32
    %c0_i32_1 = arith.constant 0 : i32
    return %c0_i32, %c0_i32_0 : i32, i32
  }
  func.func @transform_3(%arg0: i32) -> (i32, i32) {
    %c0_i32 = arith.constant 0 : i32
    %c0_i32_0 = arith.constant 0 : i32
    %c0_i32_1 = arith.constant 0 : i32
    return %c0_i32, %c0_i32_0 : i32, i32
  }
  func.func @transform_4(%arg0: i32) -> (i32, i32) {
    %c0_i32 = arith.constant 0 : i32
    %c0_i32_0 = arith.constant 0 : i32
    %c0_i32_1 = arith.constant 0 : i32
    return %c0_i32, %c0_i32_0 : i32, i32
  }
  func.func @transform_5(%arg0: i32) -> (i32, i32, i32) {
    %c0_i32 = arith.constant 0 : i32
    %c0_i32_0 = arith.constant 0 : i32
    %c0_i32_1 = arith.constant 0 : i32
    return %arg0, %c0_i32, %c0_i32_0 : i32, i32, i32
  }
}

</mosaic_0001>

<llo_original>
// kernel: tile.28
$region0: #{tile.28}
  #allocation0 [shape = 's32[1]{0}', space=sflag, size = 0x4, scoped, tag = 'scoped memory for tile.28']
  %s0 = inlined_call_operand.vmem [shape: f32[4], index: 0, kind: input, shape index: {}]
  %s1 = inlined_call_operand.vmem [shape: f32[16,4], index: 1, kind: output, shape index: {}]
  // Predicated region
  $region2: #{tile.28} parent=0 // pred_check
    _
  $region3: #{tile.28} parent=0 // pred_check_branch
    %3 = sbr.rel (0) target = $region5
  $region4: #{tile.28} parent=0 // pred_region
    _
  $region5: #{tile.28} parent=0 // pred_fallthru
    _
  %v4 = vld [vmem:[%s0] ss:$0 sm:$0xff]
  %5 = vst [vmem:[%s1] sm:$0xff] %v4
  %s6 = scalar_lea.vmem %s1, 8
  %7 = vst [vmem:[%s6] sm:$0xff] %v4

// kernel: tile.29
$region0: #{tile.29}
  %s0 = inlined_call_operand.vmem [shape: f32[16,4], index: 0, kind: input, shape index: {}]
  %s1 = inlined_call_operand.vmem [shape: f32[1,64], index: 1, kind: output, shape index: {}]
  $region1: #{tile.29} parent=0
    #allocation0 [shape = 'u8[4096]{0}', space=vmem, size = 0x1000, scoped, tag = 'scoped mem for output reshape']
    %v2 = vld [vmem:[%s0] sm:$0x1]
    %vm3 = vcmask 31744
    %4 = vst.msk [vmem:[#allocation0] sm:$0x1] %vm3, %v2
    %s5 = scalar_lea.vmem %s0, 15
    %v6 = vld [vmem:[%s5] sm:$0x1]
    %7 = vrot.lane.b32.xlu0 %v6, 60
    %v8 = vpop.permute.xlu0 %7
    %vm9 = vcmask 523744
    %10 = vst.msk [vmem:[#allocation0] sm:$0x1] %vm9, %v8
    %s11 = scalar_lea.vmem %s0, 14
    %v12 = vld [vmem:[%s11] sm:$0x1]
    %13 = vrot.lane.b32.xlu0 %v12, 56
    %v14 = vpop.permute.xlu0 %13
    %vm15 = vcmask 490944
    %16 = vst.msk [vmem:[#allocation0] sm:$0x1] %vm15, %v14
    %s17 = scalar_lea.vmem %s0, 13
    %v18 = vld [vmem:[%s17] sm:$0x1]
    %19 = vrot.lane.b32.xlu0 %v18, 52
    %v20 = vpop.permute.xlu0 %19
    %vm21 = vcmask 458144
    %22 = vst.msk [vmem:[#allocation0] sm:$0x1] %vm21, %v20
    %s23 = scalar_lea.vmem %s0, 12
    %v24 = vld [vmem:[%s23] sm:$0x1]
    %25 = vrot.lane.b32.xlu0 %v24, 48
    %v26 = vpop.permute.xlu0 %25
    %vm27 = vcmask 425344
    %28 = vst.msk [vmem:[#allocation0] sm:$0x1] %vm27, %v26
    %s29 = scalar_lea.vmem %s0, 11
    %v30 = vld [vmem:[%s29] sm:$0x1]
    %31 = vrot.lane.b32.xlu0 %v30, 44
    %v32 = vpop.permute.xlu0 %31
    %vm33 = vcmask 392544
    %34 = vst.msk [vmem:[#allocation0] sm:$0x1] %vm33, %v32
    %s35 = scalar_lea.vmem %s0, 10
    %v36 = vld [vmem:[%s35] sm:$0x1]
    %37 = vrot.lane.b32.xlu0 %v36, 40
    %v38 = vpop.permute.xlu0 %37
    %vm39 = vcmask 359744
    %40 = vst.msk [vmem:[#allocation0] sm:$0x1] %vm39, %v38
    %s41 = scalar_lea.vmem %s0, 9
    %v42 = vld [vmem:[%s41] sm:$0x1]
    %43 = vrot.lane.b32.xlu0 %v42, 36
    %v44 = vpop.permute.xlu0 %43
    %vm45 = vcmask 326944
    %46 = vst.msk [vmem:[#allocation0] sm:$0x1] %vm45, %v44
    %s47 = scalar_lea.vmem %s0, 8
    %v48 = vld [vmem:[%s47] sm:$0x1]
    %49 = vrot.lane.b32.xlu0 %v48, 32
    %v50 = vpop.permute.xlu0 %49
    %vm51 = vcmask 294144
    %52 = vst.msk [vmem:[#allocation0] sm:$0x1] %vm51, %v50
    %s53 = scalar_lea.vmem %s0, 7
    %v54 = vld [vmem:[%s53] sm:$0x1]
    %55 = vrot.lane.b32.xlu0 %v54, 28
    %v56 = vpop.permute.xlu0 %55
    %vm57 = vcmask 261344
    %58 = vst.msk [vmem:[#allocation0] sm:$0x1] %vm57, %v56
    %s59 = scalar_lea.vmem %s0, 6
    %v60 = vld [vmem:[%s59] sm:$0x1]
    %61 = vrot.lane.b32.xlu0 %v60, 24
    %v62 = vpop.permute.xlu0 %61
    %vm63 = vcmask 228544
    %64 = vst.msk [vmem:[#allocation0] sm:$0x1] %vm63, %v62
    %s65 = scalar_lea.vmem %s0, 5
    %v66 = vld [vmem:[%s65] sm:$0x1]
    %67 = vrot.lane.b32.xlu0 %v66, 20
    %v68 = vpop.permute.xlu0 %67
    %vm69 = vcmask 195744
    %70 = vst.msk [vmem:[#allocation0] sm:$0x1] %vm69, %v68
    %s71 = scalar_lea.vmem %s0, 4
    %v72 = vld [vmem:[%s71] sm:$0x1]
    %73 = vrot.lane.b32.xlu0 %v72, 16
    %v74 = vpop.permute.xlu0 %73
    %vm75 = vcmask 162944
    %76 = vst.msk [vmem:[#allocation0] sm:$0x1] %vm75, %v74
    %s77 = scalar_lea.vmem %s0, 3
    %v78 = vld [vmem:[%s77] sm:$0x1]
    %79 = vrot.lane.b32.xlu0 %v78, 12
    %v80 = vpop.permute.xlu0 %79
    %vm81 = vcmask 130144
    %82 = vst.msk [vmem:[#allocation0] sm:$0x1] %vm81, %v80
    %s83 = scalar_lea.vmem %s0, 2
    %v84 = vld [vmem:[%s83] sm:$0x1]
    %85 = vrot.lane.b32.xlu0 %v84, 8
    %v86 = vpop.permute.xlu0 %85
    %vm87 = vcmask 97344
    %88 = vst.msk [vmem:[#allocation0] sm:$0x1] %vm87, %v86
    %s89 = scalar_lea.vmem %s0, 1
    %v90 = vld [vmem:[%s89] sm:$0x1]
    %91 = vrot.lane.b32.xlu0 %v90, 4
    %v92 = vpop.permute.xlu0 %91
    %vm93 = vcmask 64544
    %94 = vst.msk [vmem:[#allocation0] sm:$0x1] %vm93, %v92
    %s96 = sshllo.u32 0, 1
    %v98 = vld [vmem:[#allocation0] sm:%s96]
    %s99 = sshllo.u32 0, 1
    %100 = vst [vmem:[%s1] sm:%s99] %v98

// kernel: squeeze.2
$region0: #{squeeze.2}
  %s0 = inlined_call_operand.vmem [shape: f32[128], index: 0, kind: input, shape index: {}]
  %s1 = inlined_call_operand.vmem [shape: f32[16,8], index: 1, kind: output, shape index: {}]
  $region1: #{squeeze.2} parent=0
    #allocation0 [shape = 'u8[4096]{0}', space=vmem, size = 0x1000, scoped, tag = 'scoped mem for input reshape']
    %s3 = sshllo.u32 0, 1
    %v4 = vld [vmem:[%s0] sm:%s3]
    %5 = vst [vmem:[#allocation0] sm:%s3] %v4
    %v6 = vld [vmem:[#allocation0] sm:$0x1]
    %vm7 = vcmask 64512
    %8 = vst.msk [vmem:[%s1] sm:$0x1] %vm7, %v6
    %v9 = vld [vmem:[#allocation0] sm:$0x1]
    %10 = vrot.lane.b32.xlu0 %v9, 120
    %v11 = vpop.permute.xlu0 %10
    %vm12 = vcmask 64512
    %s13 = scalar_lea.vmem %s1, 1
    %14 = vst.msk [vmem:[%s13] sm:$0x1] %vm12, %v11
    %v15 = vld [vmem:[#allocation0] sm:$0x1]
    %16 = vrot.lane.b32.xlu0 %v15, 112
    %v17 = vpop.permute.xlu0 %16
    %vm18 = vcmask 64512
    %s19 = scalar_lea.vmem %s1, 2
    %20 = vst.msk [vmem:[%s19] sm:$0x1] %vm18, %v17
    %v21 = vld [vmem:[#allocation0] sm:$0x1]
    %22 = vrot.lane.b32.xlu0 %v21, 104
    %v23 = vpop.permute.xlu0 %22
    %vm24 = vcmask 64512
    %s25 = scalar_lea.vmem %s1, 3
    %26 = vst.msk [vmem:[%s25] sm:$0x1] %vm24, %v23
    %v27 = vld [vmem:[#allocation0] sm:$0x1]
    %28 = vrot.lane.b32.xlu0 %v27, 96
    %v29 = vpop.permute.xlu0 %28
    %vm30 = vcmask 64512
    %s31 = scalar_lea.vmem %s1, 4
    %32 = vst.msk [vmem:[%s31] sm:$0x1] %vm30, %v29
    %v33 = vld [vmem:[#allocation0] sm:$0x1]
    %34 = vrot.lane.b32.xlu0 %v33, 88
    %v35 = vpop.permute.xlu0 %34
    %vm36 = vcmask 64512
    %s37 = scalar_lea.vmem %s1, 5
    %38 = vst.msk [vmem:[%s37] sm:$0x1] %vm36, %v35
    %v39 = vld [vmem:[#allocation0] sm:$0x1]
    %40 = vrot.lane.b32.xlu0 %v39, 80
    %v41 = vpop.permute.xlu0 %40
    %vm42 = vcmask 64512
    %s43 = scalar_lea.vmem %s1, 6
    %44 = vst.msk [vmem:[%s43] sm:$0x1] %vm42, %v41
    %v45 = vld [vmem:[#allocation0] sm:$0x1]
    %46 = vrot.lane.b32.xlu0 %v45, 72
    %v47 = vpop.permute.xlu0 %46
    %vm48 = vcmask 64512
    %s49 = scalar_lea.vmem %s1, 7
    %50 = vst.msk [vmem:[%s49] sm:$0x1] %vm48, %v47
    %v51 = vld [vmem:[#allocation0] sm:$0x1]
    %52 = vrot.lane.b32.xlu0 %v51, 64
    %v53 = vpop.permute.xlu0 %52
    %vm54 = vcmask 64512
    %s55 = scalar_lea.vmem %s1, 8
    %56 = vst.msk [vmem:[%s55] sm:$0x1] %vm54, %v53
    %v57 = vld [vmem:[#allocation0] sm:$0x1]
    %58 = vrot.lane.b32.xlu0 %v57, 56
    %v59 = vpop.permute.xlu0 %58
    %vm60 = vcmask 64512
    %s61 = scalar_lea.vmem %s1, 9
    %62 = vst.msk [vmem:[%s61] sm:$0x1] %vm60, %v59
    %v63 = vld [vmem:[#allocation0] sm:$0x1]
    %64 = vrot.lane.b32.xlu0 %v63, 48
    %v65 = vpop.permute.xlu0 %64
    %vm66 = vcmask 64512
    %s67 = scalar_lea.vmem %s1, 10
    %68 = vst.msk [vmem:[%s67] sm:$0x1] %vm66, %v65
    %v69 = vld [vmem:[#allocation0] sm:$0x1]
    %70 = vrot.lane.b32.xlu0 %v69, 40
    %v71 = vpop.permute.xlu0 %70
    %vm72 = vcmask 64512
    %s73 = scalar_lea.vmem %s1, 11
    %74 = vst.msk [vmem:[%s73] sm:$0x1] %vm72, %v71
    %v75 = vld [vmem:[#allocation0] sm:$0x1]
    %76 = vrot.lane.b32.xlu0 %v75, 32
    %v77 = vpop.permute.xlu0 %76
    %vm78 = vcmask 64512
    %s79 = scalar_lea.vmem %s1, 12
    %80 = vst.msk [vmem:[%s79] sm:$0x1] %vm78, %v77
    %v81 = vld [vmem:[#allocation0] sm:$0x1]
    %82 = vrot.lane.b32.xlu0 %v81, 24
    %v83 = vpop.permute.xlu0 %82
    %vm84 = vcmask 64512
    %s85 = scalar_lea.vmem %s1, 13
    %86 = vst.msk [vmem:[%s85] sm:$0x1] %vm84, %v83
    %v87 = vld [vmem:[#allocation0] sm:$0x1]
    %88 = vrot.lane.b32.xlu0 %v87, 16
    %v89 = vpop.permute.xlu0 %88
    %vm90 = vcmask 64512
    %s91 = scalar_lea.vmem %s1, 14
    %92 = vst.msk [vmem:[%s91] sm:$0x1] %vm90, %v89
    %v93 = vld [vmem:[#allocation0] sm:$0x1]
    %94 = vrot.lane.b32.xlu0 %v93, 8
    %v95 = vpop.permute.xlu0 %94
    %vm96 = vcmask 64512
    %s97 = scalar_lea.vmem %s1, 15
    %98 = vst.msk [vmem:[%s97] sm:$0x1] %vm96, %v95

// kernel: tile.38
$region0: #{tile.38}
  #allocation0 [shape = 's32[1]{0}', space=sflag, size = 0x4, scoped, tag = 'scoped memory for tile.38']
  %s0 = inlined_call_operand.vmem [shape: f32[8], index: 0, kind: input, shape index: {}]
  %s1 = inlined_call_operand.vmem [shape: f32[16,8], index: 1, kind: output, shape index: {}]
  // Predicated region
  $region2: #{tile.38} parent=0 // pred_check
    _
  $region3: #{tile.38} parent=0 // pred_check_branch
    %3 = sbr.rel (0) target = $region5
  $region4: #{tile.38} parent=0 // pred_region
    _
  $region5: #{tile.38} parent=0 // pred_fallthru
    _
  %v4 = vld [vmem:[%s0] ss:$0 sm:$0xff]
  %5 = vst [vmem:[%s1] sm:$0xff] %v4
  %s6 = scalar_lea.vmem %s1, 8
  %7 = vst [vmem:[%s6] sm:$0xff] %v4

// kernel: tile.39
$region0: #{tile.39}
  %s0 = inlined_call_operand.vmem [shape: f32[16,8], index: 0, kind: input, shape index: {}]
  %s1 = inlined_call_operand.vmem [shape: f32[1,128], index: 1, kind: output, shape index: {}]
  $region1: #{tile.39} parent=0
    #allocation0 [shape = 'u8[4096]{0}', space=vmem, size = 0x1000, scoped, tag = 'scoped mem for output reshape']
    %v2 = vld [vmem:[%s0] sm:$0x1]
    %vm3 = vcmask 64512
    %4 = vst.msk [vmem:[#allocation0] sm:$0x1] %vm3, %v2
    %s5 = scalar_lea.vmem %s0, 15
    %v6 = vld [vmem:[%s5] sm:$0x1]
    %7 = vrot.lane.b32.xlu0 %v6, 120
    %v8 = vpop.permute.xlu0 %7
    %vm9 = vcmask 1048512
    %10 = vst.msk [vmem:[#allocation0] sm:$0x1] %vm9, %v8
    %s11 = scalar_lea.vmem %s0, 14
    %v12 = vld [vmem:[%s11] sm:$0x1]
    %13 = vrot.lane.b32.xlu0 %v12, 112
    %v14 = vpop.permute.xlu0 %13
    %vm15 = vcmask 982912
    %16 = vst.msk [vmem:[#allocation0] sm:$0x1] %vm15, %v14
    %s17 = scalar_lea.vmem %s0, 13
    %v18 = vld [vmem:[%s17] sm:$0x1]
    %19 = vrot.lane.b32.xlu0 %v18, 104
    %v20 = vpop.permute.xlu0 %19
    %vm21 = vcmask 917312
    %22 = vst.msk [vmem:[#allocation0] sm:$0x1] %vm21, %v20
    %s23 = scalar_lea.vmem %s0, 12
    %v24 = vld [vmem:[%s23] sm:$0x1]
    %25 = vrot.lane.b32.xlu0 %v24, 96
    %v26 = vpop.permute.xlu0 %25
    %vm27 = vcmask 851712
    %28 = vst.msk [vmem:[#allocation0] sm:$0x1] %vm27, %v26
    %s29 = scalar_lea.vmem %s0, 11
    %v30 = vld [vmem:[%s29] sm:$0x1]
    %31 = vrot.lane.b32.xlu0 %v30, 88
    %v32 = vpop.permute.xlu0 %31
    %vm33 = vcmask 786112
    %34 = vst.msk [vmem:[#allocation0] sm:$0x1] %vm33, %v32
    %s35 = scalar_lea.vmem %s0, 10
    %v36 = vld [vmem:[%s35] sm:$0x1]
    %37 = vrot.lane.b32.xlu0 %v36, 80
    %v38 = vpop.permute.xlu0 %37
    %vm39 = vcmask 720512
    %40 = vst.msk [vmem:[#allocation0] sm:$0x1] %vm39, %v38
    %s41 = scalar_lea.vmem %s0, 9
    %v42 = vld [vmem:[%s41] sm:$0x1]
    %43 = vrot.lane.b32.xlu0 %v42, 72
    %v44 = vpop.permute.xlu0 %43
    %vm45 = vcmask 654912
    %46 = vst.msk [vmem:[#allocation0] sm:$0x1] %vm45, %v44
    %s47 = scalar_lea.vmem %s0, 8
    %v48 = vld [vmem:[%s47] sm:$0x1]
    %49 = vrot.lane.b32.xlu0 %v48, 64
    %v50 = vpop.permute.xlu0 %49
    %vm51 = vcmask 589312
    %52 = vst.msk [vmem:[#allocation0] sm:$0x1] %vm51, %v50
    %s53 = scalar_lea.vmem %s0, 7
    %v54 = vld [vmem:[%s53] sm:$0x1]
    %55 = vrot.lane.b32.xlu0 %v54, 56
    %v56 = vpop.permute.xlu0 %55
    %vm57 = vcmask 523712
    %58 = vst.msk [vmem:[#allocation0] sm:$0x1] %vm57, %v56
    %s59 = scalar_lea.vmem %s0, 6
    %v60 = vld [vmem:[%s59] sm:$0x1]
    %61 = vrot.lane.b32.xlu0 %v60, 48
    %v62 = vpop.permute.xlu0 %61
    %vm63 = vcmask 458112
    %64 = vst.msk [vmem:[#allocation0] sm:$0x1] %vm63, %v62
    %s65 = scalar_lea.vmem %s0, 5
    %v66 = vld [vmem:[%s65] sm:$0x1]
    %67 = vrot.lane.b32.xlu0 %v66, 40
    %v68 = vpop.permute.xlu0 %67
    %vm69 = vcmask 392512
    %70 = vst.msk [vmem:[#allocation0] sm:$0x1] %vm69, %v68
    %s71 = scalar_lea.vmem %s0, 4
    %v72 = vld [vmem:[%s71] sm:$0x1]
    %73 = vrot.lane.b32.xlu0 %v72, 32
    %v74 = vpop.permute.xlu0 %73
    %vm75 = vcmask 326912
    %76 = vst.msk [vmem:[#allocation0] sm:$0x1] %vm75, %v74
    %s77 = scalar_lea.vmem %s0, 3
    %v78 = vld [vmem:[%s77] sm:$0x1]
    %79 = vrot.lane.b32.xlu0 %v78, 24
    %v80 = vpop.permute.xlu0 %79
    %vm81 = vcmask 261312
    %82 = vst.msk [vmem:[#allocation0] sm:$0x1] %vm81, %v80
    %s83 = scalar_lea.vmem %s0, 2
    %v84 = vld [vmem:[%s83] sm:$0x1]
    %85 = vrot.lane.b32.xlu0 %v84, 16
    %v86 = vpop.permute.xlu0 %85
    %vm87 = vcmask 195712
    %88 = vst.msk [vmem:[#allocation0] sm:$0x1] %vm87, %v86
    %s89 = scalar_lea.vmem %s0, 1
    %v90 = vld [vmem:[%s89] sm:$0x1]
    %91 = vrot.lane.b32.xlu0 %v90, 8
    %v92 = vpop.permute.xlu0 %91
    %vm93 = vcmask 130112
    %94 = vst.msk [vmem:[#allocation0] sm:$0x1] %vm93, %v92
    %s96 = sshllo.u32 0, 1
    %v98 = vld [vmem:[#allocation0] sm:%s96]
    %s99 = sshllo.u32 0, 1
    %100 = vst [vmem:[%s1] sm:%s99] %v98

// kernel: preact_block.2
$region0: #{preact_block.2}
  #allocation0 [shape = 'u32[]', space=smem, size = 0x4, offset = 0x4, fixed_abs, tag = 'smem constant byte address 0x4 - core index']
  #allocation1 [shape = 'u32[144,128]{1,0:T(1,128)}', space=vmem, size = 0x12000, scoped, tag = 'internal scratch']
  %s0 = inlined_call_operand.vmem [shape: f32[2,16,64], index: 0, kind: input, shape index: {}]
  %s1 = inlined_call_operand.vmem [shape: f32[1,64], index: 1, kind: input, shape index: {}]
  %s2 = inlined_call_operand.vmem [shape: f32[1,64], index: 2, kind: input, shape index: {}]
  %s3 = inlined_call_operand.vmem [shape: f32[192,256], index: 3, kind: input, shape index: {}]
  %s4 = inlined_call_operand.vmem [shape: f32[2,16,128], index: 4, kind: output, shape index: {0}]
  %s5 = inlined_call_operand.vmem [shape: f32[2,16,128], index: 5, kind: output, shape index: {1}]
  %s6 = inlined_call_operand.vmem [shape: f32[1,2,128], index: 6, kind: output, shape index: {2}]
  %7 = xla_tuple %s4, %s5, %s6
  %s8 = sld [smem:[#allocation0]]
  $region42: #{preact_block.2} parent=0
    _
  %s10 = ssub.s32 1, %s8
  %s11 = scalar_select 0, %s10, %s8
  // Predicated region
  $region2: #{preact_block.2} parent=0 // pred_check
    _
  $region3: #{preact_block.2} parent=0 // pred_check_branch
    %13 = sbr.rel (0) target = $region5
  $region4: #{preact_block.2} parent=0 // pred_region
    _
  $region5: #{preact_block.2} parent=0 // pred_fallthru
    _
  // Predicated region
  $region6: #{preact_block.2} parent=0 // pred_check
    _
  $region7: #{preact_block.2} parent=0 // pred_check_branch
    %15 = sbr.rel (0) target = $region9
  $region8: #{preact_block.2} parent=0 // pred_region
    _
  $region9: #{preact_block.2} parent=0 // pred_fallthru
    _
  // Predicated region
  $region10: #{preact_block.2} parent=0 // pred_check
    _
  $region11: #{preact_block.2} parent=0 // pred_check_branch
    %17 = sbr.rel (0) target = $region13
  $region12: #{preact_block.2} parent=0 // pred_region
    _
  $region13: #{preact_block.2} parent=0 // pred_fallthru
    _
  // Predicated region
  $region14: #{preact_block.2} parent=0 // pred_check
    _
  $region15: #{preact_block.2} parent=0 // pred_check_branch
    %19 = sbr.rel (0) target = $region17
  $region16: #{preact_block.2} parent=0 // pred_region
    _
  $region17: #{preact_block.2} parent=0 // pred_fallthru
    _
  %v20 = vld [vmem:[%s0] sm:$0xff]
  %v21 = vld [vmem:[%s0 + $0x8] sm:$0xff]
  %v22 = vld [vmem:[%s0 + $0x10] sm:$0xff]
  %v23 = vld [vmem:[%s0 + $0x18] sm:$0xff]
  %v24 = vld [vmem:[%s1] sm:$0x1]
  %v26 = vlaneseq
  %v27 = vshrl.u32 %v26, 7
  %v28 = vsub.s32 0, %v27
  %v29 = vrot.slane %v24, %v28
  %v31 = vmul.f32 %v20, %v29
  %v32 = vmul.f32 %v21, %v29
  %v33 = vmul.f32 %v22, %v29
  %v34 = vmul.f32 %v23, %v29
  %v35 = vld [vmem:[%s2] sm:$0x1]
  %v37 = vlaneseq
  %v38 = vshrl.u32 %v37, 7
  %v39 = vsub.s32 0, %v38
  %v40 = vrot.slane %v35, %v39
  %v42 = vadd.f32 %v31, %v40
  %v43 = vadd.f32 %v32, %v40
  %v44 = vadd.f32 %v33, %v40
  %v45 = vadd.f32 %v34, %v40
  %v46 = vmax.f32 %v42, 0.0
  %v47 = vmax.f32 %v43, 0.0
  %v48 = vmax.f32 %v44, 0.0
  %v49 = vmax.f32 %v45, 0.0
  %vm54 = vcmask 1040384
  %v55 = vrot.slane %v46, 7
  %v56 = vrot.slane %v47, 7
  %v57 = vsel %vm54, %v55, %v56
  %v58 = vrot.slane %v48, 7
  %v59 = vrot.slane %v49, 7
  %v60 = vsel %vm54, %v58, %v59
  %v67 = vsel %vm54, 0.0, %v55
  %v68 = vsel %vm54, 0.0, %v58
  %v69 = vsel %vm54, %v56, 0.0
  %v70 = vsel %vm54, %v59, 0.0
  %vm75 = vcmask 1046528
  %v76 = vrot.slane %v67, 1
  %v77 = vrot.slane %v57, 1
  %v78 = vsel %vm75, %v76, %v77
  %v79 = vrot.slane %v69, 1
  %v80 = vsel %vm75, %v77, %v79
  %v81 = vrot.slane %v68, 1
  %v82 = vrot.slane %v60, 1
  %v83 = vsel %vm75, %v81, %v82
  %v84 = vrot.slane %v70, 1
  %v85 = vsel %vm75, %v82, %v84
  %86 = vrot.lane.b32.xlu0 %v78, 64
  %v87 = vpop.permute.xlu0 %86
  %88 = vrot.lane.b32.xlu0 %v80, 64
  %v89 = vpop.permute.xlu0 %88
  %90 = vrot.lane.b32.xlu0 %v83, 64
  %v91 = vpop.permute.xlu0 %90
  %92 = vrot.lane.b32.xlu0 %v85, 64
  %v93 = vpop.permute.xlu0 %92
  %vm98 = vcmask 1045504
  %v99 = vrot.slane %v67, 2
  %v100 = vrot.slane %v57, 2
  %v101 = vsel %vm98, %v99, %v100
  %v102 = vrot.slane %v69, 2
  %v103 = vsel %vm98, %v100, %v102
  %v104 = vrot.slane %v68, 2
  %v105 = vrot.slane %v60, 2
  %v106 = vsel %vm98, %v104, %v105
  %v107 = vrot.slane %v70, 2
  %v108 = vsel %vm98, %v105, %v107
  %vm109 = vcmask 523264
  %v110 = vsel %vm109, %v67, %v87
  %v111 = vsel %vm109, %v57, %v89
  %v112 = vsel %vm109, %v68, %v91
  %v113 = vsel %vm109, %v60, %v93
  %v114 = vld [vmem:[%s3] sm:$0xff]
  %v115 = vld [vmem:[%s3 + $0x8] sm:$0xff]
  %v116 = vld [vmem:[%s3 + $0x10] sm:$0xff]
  %v117 = vld [vmem:[%s3 + $0x18] sm:$0xff]
  %v118 = vld [vmem:[%s3 + $0x20] sm:$0xff]
  %v119 = vld [vmem:[%s3 + $0x28] sm:$0xff]
  %v120 = vld [vmem:[%s3 + $0x30] sm:$0xff]
  %v121 = vld [vmem:[%s3 + $0x38] sm:$0xff]
  %v122 = vld [vmem:[%s3 + $0x40] sm:$0xff]
  %v123 = vld [vmem:[%s3 + $0x48] sm:$0xff]
  %v124 = vld [vmem:[%s3 + $0x50] sm:$0xff]
  %v125 = vld [vmem:[%s3 + $0x58] sm:$0xff]
  %v126 = vld [vmem:[%s3 + $0x60] sm:$0xff]
  %v127 = vld [vmem:[%s3 + $0x68] sm:$0xff]
  %v128 = vld [vmem:[%s3 + $0x70] sm:$0xff]
  %v129 = vld [vmem:[%s3 + $0x78] sm:$0xff]
  %v130 = vld [vmem:[%s3 + $0x80] sm:$0xff]
  %v131 = vld [vmem:[%s3 + $0x88] sm:$0xff]
  %v132 = vld [vmem:[%s3 + $0x90] sm:$0xff]
  %v133 = vld [vmem:[%s3 + $0x98] sm:$0xff]
  %v134 = vld [vmem:[%s3 + $0xa0] sm:$0xff]
  %v135 = vld [vmem:[%s3 + $0xa8] sm:$0xff]
  %v136 = vld [vmem:[%s3 + $0xb0] sm:$0xff]
  %v137 = vld [vmem:[%s3 + $0xb8] sm:$0xff]
  %v138 = vld [vmem:[%s3 + $0xc0] sm:$0xff]
  %v139 = vld [vmem:[%s3 + $0xc8] sm:$0xff]
  %v140 = vld [vmem:[%s3 + $0xd0] sm:$0xff]
  %v141 = vld [vmem:[%s3 + $0xd8] sm:$0xff]
  %v142 = vld [vmem:[%s3 + $0xe0] sm:$0xff]
  %v143 = vld [vmem:[%s3 + $0xe8] sm:$0xff]
  %v144 = vld [vmem:[%s3 + $0xf0] sm:$0xff]
  %v145 = vld [vmem:[%s3 + $0xf8] sm:$0xff]
  %v146 = vld [vmem:[%s3 + $0x100] sm:$0xff]
  %v147 = vld [vmem:[%s3 + $0x108] sm:$0xff]
  %v148 = vld [vmem:[%s3 + $0x110] sm:$0xff]
  %v149 = vld [vmem:[%s3 + $0x118] sm:$0xff]
  %v150 = vld [vmem:[%s3 + $0x120] sm:$0xff]
  %v151 = vld [vmem:[%s3 + $0x128] sm:$0xff]
  %v152 = vld [vmem:[%s3 + $0x130] sm:$0xff]
  %v153 = vld [vmem:[%s3 + $0x138] sm:$0xff]
  %v154 = vld [vmem:[%s3 + $0x140] sm:$0xff]
  %v155 = vld [vmem:[%s3 + $0x148] sm:$0xff]
  %v156 = vld [vmem:[%s3 + $0x150] sm:$0xff]
  %v157 = vld [vmem:[%s3 + $0x158] sm:$0xff]
  %v158 = vld [vmem:[%s3 + $0x160] sm:$0xff]
  %v159 = vld [vmem:[%s3 + $0x168] sm:$0xff]
  %v160 = vld [vmem:[%s3 + $0x170] sm:$0xff]
  %v161 = vld [vmem:[%s3 + $0x178] sm:$0xff]
  %v162 = vsel %vm109, %v101, 0
  %v164 = vsel %vm109, %v103, 0
  %v166 = vsel %vm109, %v106, 0
  %v168 = vsel %vm109, %v108, 0
  %170 = vmatprep.subr.mxu0 %v115
  %171 = vmatpush1.msra.mxu0 %v114
  %172 = vmatprep.subr.mxu0 %v117
  %173 = vmatpush1.msra.mxu0 %v116
  %174 = vmatprep.subr.mxu0 %v119
  %175 = vmatpush1.msra.mxu0 %v118
  %176 = vmatprep.subr.mxu0 %v121
  %177 = vmatpush1.msra.mxu0 %v120
  %178 = vmatprep.subr.mxu0 %v123
  %179 = vmatpush1.msra.mxu0 %v122
  %180 = vmatprep.subr.mxu0 %v125
  %181 = vmatpush1.msra.mxu0 %v124
  %182 = vmatprep.subr.mxu0 %v127
  %183 = vmatpush1.msra.mxu0 %v126
  %184 = vmatprep.subr.mxu0 %v129
  %185 = vmatpush1.msra.mxu0 %v128
  %186 = vmatprep.subr.mxu0 %v131
  %187 = vmatpush1.msra.mxu0 %v130
  %188 = vmatprep.subr.mxu0 %v133
  %189 = vmatpush1.msra.mxu0 %v132
  %190 = vmatprep.subr.mxu0 %v135
  %191 = vmatpush1.msra.mxu0 %v134
  %192 = vmatprep.subr.mxu0 %v137
  %193 = vmatpush1.msra.mxu0 %v136
  %194 = vmatprep.subr.mxu0 %v139
  %195 = vmatpush1.msra.mxu0 %v138
  %196 = vmatprep.subr.mxu0 %v141
  %197 = vmatpush1.msra.mxu0 %v140
  %198 = vmatprep.subr.mxu0 %v143
  %199 = vmatpush1.msra.mxu0 %v142
  %200 = vmatprep.subr.mxu0 %v145
  %201 = vmatpush1.msra.mxu0 %v144
  %202 = vmatprep.subr.mxu0 %v147
  %203 = vmatpush1.msra.mxu0 %v146
  %204 = vmatprep.subr.mxu0 %v149
  %205 = vmatpush1.msra.mxu0 %v148
  %206 = vmatprep.subr.mxu0 %v151
  %207 = vmatpush1.msra.mxu0 %v150
  %208 = vmatprep.subr.mxu0 %v153
  %209 = vmatpush1.msra.mxu0 %v152
  %210 = vmatprep.subr.mxu0 %v155
  %211 = vmatpush1.msra.mxu0 %v154
  %212 = vmatprep.subr.mxu0 %v157
  %213 = vmatpush1.msra.mxu0 %v156
  %214 = vmatprep.subr.mxu0 %v159
  %215 = vmatpush1.msra.mxu0 %v158
  %216 = vmatprep.subr.mxu0 %v161
  %217 = vmatpush1.msra.mxu0 %v160
  %218 = vmatprep.subr.mxu0 0.0
  %219 = vmatpush1.msra.mxu0 0.0
  %220 = vmatprep.subr.mxu0 0.0
  %221 = vmatpush1.msra.mxu0 0.0
  %222 = vmatprep.subr.mxu0 0.0
  %223 = vmatpush1.msra.mxu0 0.0
  %224 = vmatprep.subr.mxu0 0.0
  %225 = vmatpush1.msra.mxu0 0.0
  %226 = vmatprep.subr.mxu0 0.0
  %227 = vmatpush1.msra.mxu0 0.0
  %228 = vmatprep.subr.mxu0 0.0
  %229 = vmatpush1.msra.mxu0 0.0
  %230 = vmatprep.subr.mxu0 0.0
  %231 = vmatpush1.msra.mxu0 0.0
  %232 = vmatprep.subr.mxu0 0.0
  %233 = vmatpush1.msra.mxu0 0.0
  %234 = vmatprep.mubr.f32.mxu0 %v162
  %235 = vmatmul.mubr.f32.gmra.mrb[0].mxu0 %v110
  %v236 = vpop.f32.mrb[0].mxu0
  %v237 = vadd.f32 0.0, %v236
  %v238 = vpop.f32.mrb[0].mxu0
  %v239 = vadd.f32 0.0, %v238
  %240 = vmatprep.mubr.f32.mxu0 %v164
  %241 = vmatmul.mubr.f32.gmra.mrb[0].mxu0 %v111
  %v242 = vpop.f32.mrb[0].mxu0
  %v243 = vadd.f32 0.0, %v242
  %v244 = vpop.f32.mrb[0].mxu0
  %v245 = vadd.f32 0.0, %v244
  %246 = vmatprep.mubr.f32.mxu0 %v166
  %247 = vmatmul.mubr.f32.gmra.mrb[0].mxu0 %v112
  %v248 = vpop.f32.mrb[0].mxu0
  %v249 = vadd.f32 0.0, %v248
  %v250 = vpop.f32.mrb[0].mxu0
  %v251 = vadd.f32 0.0, %v250
  %252 = vmatprep.mubr.f32.mxu0 %v168
  %253 = vmatmul.mubr.f32.gmra.mrb[0].mxu0 %v113
  %v254 = vpop.f32.mrb[0].mxu0
  %v255 = vadd.f32 0.0, %v254
  %v256 = vpop.f32.mrb[0].mxu0
  %v257 = vadd.f32 0.0, %v256
  %258 = vdwg.mxu0
  %259 = vst [vmem:[%s4] sm:$0xff] %v237
  %260 = vst [vmem:[%s4 + $0x8] sm:$0xff] %v243
  %261 = vst [vmem:[%s4 + $0x10] sm:$0xff] %v249
  %262 = vst [vmem:[%s4 + $0x18] sm:$0xff] %v255
  %263 = vst [vmem:[%s5] sm:$0xff] %v239
  %264 = vst [vmem:[%s5 + $0x8] sm:$0xff] %v245
  %265 = vst [vmem:[%s5 + $0x10] sm:$0xff] %v251
  %266 = vst [vmem:[%s5 + $0x18] sm:$0xff] %v257
  %v267 = vadd.f32 %v237, %v243
  %v268 = vadd.f32 %v267, %v249
  %v269 = vadd.f32 %v268, %v255
  %v270 = vrot.slane %v269, 4
  %v271 = vadd.f32 %v269, %v270
  %v272 = vrot.slane %v271, 2
  %v273 = vadd.f32 %v271, %v272
  %v274 = vrot.slane %v273, 1
  %v275 = vadd.f32 %v273, %v274
  %v276 = vmul.f32 %v237, %v237
  %v277 = vmul.f32 %v243, %v243
  %v278 = vmul.f32 %v249, %v249
  %v279 = vmul.f32 %v255, %v255
  %v280 = vadd.f32 %v276, %v277
  %v281 = vadd.f32 %v280, %v278
  %v282 = vadd.f32 %v281, %v279
  %v283 = vrot.slane %v282, 4
  %v284 = vadd.f32 %v282, %v283
  %v285 = vrot.slane %v284, 2
  %v286 = vadd.f32 %v284, %v285
  %v287 = vrot.slane %v286, 1
  %v288 = vadd.f32 %v286, %v287
  %v289 = vsel %vm54, %v275, %v288
  %290 = vst [vmem:[%s6] sm:$0x3] %v289
  // Predicated region
  $region18: #{preact_block.2} parent=0 // pred_check
    _
  $region19: #{preact_block.2} parent=0 // pred_check_branch
    %292 = sbr.rel (0) target = $region21
  $region20: #{preact_block.2} parent=0 // pred_region
    _
  $region21: #{preact_block.2} parent=0 // pred_fallthru
    _
  // Predicated region
  $region22: #{preact_block.2} parent=0 // pred_check
    _
  $region23: #{preact_block.2} parent=0 // pred_check_branch
    %294 = sbr.rel (0) target = $region25
  $region24: #{preact_block.2} parent=0 // pred_region
    _
  $region25: #{preact_block.2} parent=0 // pred_fallthru
    _
  // Predicated region
  $region26: #{preact_block.2} parent=0 // pred_check
    _
  $region27: #{preact_block.2} parent=0 // pred_check_branch
    %296 = sbr.rel (0) target = $region29
  $region28: #{preact_block.2} parent=0 // pred_region
    _
  $region29: #{preact_block.2} parent=0 // pred_fallthru
    _
  // Predicated region
  $region30: #{preact_block.2} parent=0 // pred_check
    _
  $region31: #{preact_block.2} parent=0 // pred_check_branch
    %298 = sbr.rel (0) target = $region33
  $region32: #{preact_block.2} parent=0 // pred_region
    _
  $region33: #{preact_block.2} parent=0 // pred_fallthru
    _
  // Predicated region
  $region34: #{preact_block.2} parent=0 // pred_check
    _
  $region35: #{preact_block.2} parent=0 // pred_check_branch
    %300 = sbr.rel (0) target = $region37
  $region36: #{preact_block.2} parent=0 // pred_region
    _
  $region37: #{preact_block.2} parent=0 // pred_fallthru
    _
  // Predicated region
  $region38: #{preact_block.2} parent=0 // pred_check
    _
  $region39: #{preact_block.2} parent=0 // pred_check_branch
    %302 = sbr.rel (0) target = $region41
  $region40: #{preact_block.2} parent=0 // pred_region
    _
  $region41: #{preact_block.2} parent=0 // pred_fallthru
    _

// kernel: preact_block.3
$region0: #{preact_block.3}
  #allocation0 [shape = 'u32[]', space=smem, size = 0x4, offset = 0x4, fixed_abs, tag = 'smem constant byte address 0x4 - core index']
  #allocation1 [shape = 'u32[144,128]{1,0:T(1,128)}', space=vmem, size = 0x12000, scoped, tag = 'internal scratch']
  %s0 = inlined_call_operand.vmem [shape: f32[2,16,128], index: 0, kind: input, shape index: {}]
  %s1 = inlined_call_operand.vmem [shape: f32[2,16,128], index: 1, kind: input, shape index: {}]
  %s2 = inlined_call_operand.vmem [shape: f32[1,128], index: 2, kind: input, shape index: {}]
  %s3 = inlined_call_operand.vmem [shape: f32[1,128], index: 3, kind: input, shape index: {}]
  %s4 = inlined_call_operand.vmem [shape: f32[384,128], index: 4, kind: input, shape index: {}]
  %s5 = inlined_call_operand.vmem [shape: f32[2,16,128], index: 5, kind: output, shape index: {}]
  %s6 = sld [smem:[#allocation0]]
  $region30: #{preact_block.3} parent=0
    _
  %s8 = ssub.s32 1, %s6
  %s9 = scalar_select 0, %s8, %s6
  // Predicated region
  $region2: #{preact_block.3} parent=0 // pred_check
    _
  $region3: #{preact_block.3} parent=0 // pred_check_branch
    %11 = sbr.rel (0) target = $region5
  $region4: #{preact_block.3} parent=0 // pred_region
    _
  $region5: #{preact_block.3} parent=0 // pred_fallthru
    _
  // Predicated region
  $region6: #{preact_block.3} parent=0 // pred_check
    _
  $region7: #{preact_block.3} parent=0 // pred_check_branch
    %13 = sbr.rel (0) target = $region9
  $region8: #{preact_block.3} parent=0 // pred_region
    _
  $region9: #{preact_block.3} parent=0 // pred_fallthru
    _
  // Predicated region
  $region10: #{preact_block.3} parent=0 // pred_check
    _
  $region11: #{preact_block.3} parent=0 // pred_check_branch
    %15 = sbr.rel (0) target = $region13
  $region12: #{preact_block.3} parent=0 // pred_region
    _
  $region13: #{preact_block.3} parent=0 // pred_fallthru
    _
  // Predicated region
  $region14: #{preact_block.3} parent=0 // pred_check
    _
  $region15: #{preact_block.3} parent=0 // pred_check_branch
    %17 = sbr.rel (0) target = $region17
  $region16: #{preact_block.3} parent=0 // pred_region
    _
  $region17: #{preact_block.3} parent=0 // pred_fallthru
    _
  // Predicated region
  $region18: #{preact_block.3} parent=0 // pred_check
    _
  $region19: #{preact_block.3} parent=0 // pred_check_branch
    %19 = sbr.rel (0) target = $region21
  $region20: #{preact_block.3} parent=0 // pred_region
    _
  $region21: #{preact_block.3} parent=0 // pred_fallthru
    _
  %v20 = vld [vmem:[%s0] sm:$0xff]
  %v21 = vld [vmem:[%s0 + $0x8] sm:$0xff]
  %v22 = vld [vmem:[%s0 + $0x10] sm:$0xff]
  %v23 = vld [vmem:[%s0 + $0x18] sm:$0xff]
  %v24 = vld [vmem:[%s2] sm:$0x1]
  %v26 = vlaneseq
  %v27 = vshrl.u32 %v26, 7
  %v28 = vsub.s32 0, %v27
  %v29 = vrot.slane %v24, %v28
  %v31 = vmul.f32 %v20, %v29
  %v32 = vmul.f32 %v21, %v29
  %v33 = vmul.f32 %v22, %v29
  %v34 = vmul.f32 %v23, %v29
  %v35 = vld [vmem:[%s3] sm:$0x1]
  %v37 = vlaneseq
  %v38 = vshrl.u32 %v37, 7
  %v39 = vsub.s32 0, %v38
  %v40 = vrot.slane %v35, %v39
  %v42 = vadd.f32 %v31, %v40
  %v43 = vadd.f32 %v32, %v40
  %v44 = vadd.f32 %v33, %v40
  %v45 = vadd.f32 %v34, %v40
  %v46 = vmax.f32 %v42, 0.0
  %v47 = vmax.f32 %v43, 0.0
  %v48 = vmax.f32 %v44, 0.0
  %v49 = vmax.f32 %v45, 0.0
  %vm54 = vcmask 1040384
  %v55 = vrot.slane %v46, 7
  %v56 = vrot.slane %v47, 7
  %v57 = vsel %vm54, %v55, %v56
  %v58 = vrot.slane %v48, 7
  %v59 = vrot.slane %v49, 7
  %v60 = vsel %vm54, %v58, %v59
  %v67 = vsel %vm54, 0.0, %v55
  %v68 = vsel %vm54, 0.0, %v58
  %v69 = vsel %vm54, %v56, 0.0
  %v70 = vsel %vm54, %v59, 0.0
  %vm75 = vcmask 1046528
  %v76 = vrot.slane %v67, 1
  %v77 = vrot.slane %v57, 1
  %v78 = vsel %vm75, %v76, %v77
  %v79 = vrot.slane %v69, 1
  %v80 = vsel %vm75, %v77, %v79
  %v81 = vrot.slane %v68, 1
  %v82 = vrot.slane %v60, 1
  %v83 = vsel %vm75, %v81, %v82
  %v84 = vrot.slane %v70, 1
  %v85 = vsel %vm75, %v82, %v84
  %vm90 = vcmask 1045504
  %v91 = vrot.slane %v67, 2
  %v92 = vrot.slane %v57, 2
  %v93 = vsel %vm90, %v91, %v92
  %v94 = vrot.slane %v69, 2
  %v95 = vsel %vm90, %v92, %v94
  %v96 = vrot.slane %v68, 2
  %v97 = vrot.slane %v60, 2
  %v98 = vsel %vm90, %v96, %v97
  %v99 = vrot.slane %v70, 2
  %v100 = vsel %vm90, %v97, %v99
  %v105 = vld [vmem:[%s4] sm:$0xff]
  %v106 = vld [vmem:[%s4 + $0x8] sm:$0xff]
  %v107 = vld [vmem:[%s4 + $0x10] sm:$0xff]
  %v108 = vld [vmem:[%s4 + $0x18] sm:$0xff]
  %v109 = vld [vmem:[%s4 + $0x20] sm:$0xff]
  %v110 = vld [vmem:[%s4 + $0x28] sm:$0xff]
  %v111 = vld [vmem:[%s4 + $0x30] sm:$0xff]
  %v112 = vld [vmem:[%s4 + $0x38] sm:$0xff]
  %v113 = vld [vmem:[%s4 + $0x40] sm:$0xff]
  %v114 = vld [vmem:[%s4 + $0x48] sm:$0xff]
  %v115 = vld [vmem:[%s4 + $0x50] sm:$0xff]
  %v116 = vld [vmem:[%s4 + $0x58] sm:$0xff]
  %v117 = vld [vmem:[%s4 + $0x60] sm:$0xff]
  %v118 = vld [vmem:[%s4 + $0x68] sm:$0xff]
  %v119 = vld [vmem:[%s4 + $0x70] sm:$0xff]
  %v120 = vld [vmem:[%s4 + $0x78] sm:$0xff]
  %v121 = vld [vmem:[%s4 + $0x80] sm:$0xff]
  %v122 = vld [vmem:[%s4 + $0x88] sm:$0xff]
  %v123 = vld [vmem:[%s4 + $0x90] sm:$0xff]
  %v124 = vld [vmem:[%s4 + $0x98] sm:$0xff]
  %v125 = vld [vmem:[%s4 + $0xa0] sm:$0xff]
  %v126 = vld [vmem:[%s4 + $0xa8] sm:$0xff]
  %v127 = vld [vmem:[%s4 + $0xb0] sm:$0xff]
  %v128 = vld [vmem:[%s4 + $0xb8] sm:$0xff]
  %v129 = vld [vmem:[%s4 + $0xc0] sm:$0xff]
  %v130 = vld [vmem:[%s4 + $0xc8] sm:$0xff]
  %v131 = vld [vmem:[%s4 + $0xd0] sm:$0xff]
  %v132 = vld [vmem:[%s4 + $0xd8] sm:$0xff]
  %v133 = vld [vmem:[%s4 + $0xe0] sm:$0xff]
  %v134 = vld [vmem:[%s4 + $0xe8] sm:$0xff]
  %v135 = vld [vmem:[%s4 + $0xf0] sm:$0xff]
  %v136 = vld [vmem:[%s4 + $0xf8] sm:$0xff]
  %v137 = vld [vmem:[%s4 + $0x100] sm:$0xff]
  %v138 = vld [vmem:[%s4 + $0x108] sm:$0xff]
  %v139 = vld [vmem:[%s4 + $0x110] sm:$0xff]
  %v140 = vld [vmem:[%s4 + $0x118] sm:$0xff]
  %v141 = vld [vmem:[%s4 + $0x120] sm:$0xff]
  %v142 = vld [vmem:[%s4 + $0x128] sm:$0xff]
  %v143 = vld [vmem:[%s4 + $0x130] sm:$0xff]
  %v144 = vld [vmem:[%s4 + $0x138] sm:$0xff]
  %v145 = vld [vmem:[%s4 + $0x140] sm:$0xff]
  %v146 = vld [vmem:[%s4 + $0x148] sm:$0xff]
  %v147 = vld [vmem:[%s4 + $0x150] sm:$0xff]
  %v148 = vld [vmem:[%s4 + $0x158] sm:$0xff]
  %v149 = vld [vmem:[%s4 + $0x160] sm:$0xff]
  %v150 = vld [vmem:[%s4 + $0x168] sm:$0xff]
  %v151 = vld [vmem:[%s4 + $0x170] sm:$0xff]
  %v152 = vld [vmem:[%s4 + $0x178] sm:$0xff]
  %153 = vmatprep.subr.mxu0 0.0
  %154 = vmatpush1.msra.mxu0 %v105
  %155 = vmatprep.subr.mxu0 0.0
  %156 = vmatpush1.msra.mxu0 %v106
  %157 = vmatprep.subr.mxu0 0.0
  %158 = vmatpush1.msra.mxu0 %v107
  %159 = vmatprep.subr.mxu0 0.0
  %160 = vmatpush1.msra.mxu0 %v108
  %161 = vmatprep.subr.mxu0 0.0
  %162 = vmatpush1.msra.mxu0 %v109
  %163 = vmatprep.subr.mxu0 0.0
  %164 = vmatpush1.msra.mxu0 %v110
  %165 = vmatprep.subr.mxu0 0.0
  %166 = vmatpush1.msra.mxu0 %v111
  %167 = vmatprep.subr.mxu0 0.0
  %168 = vmatpush1.msra.mxu0 %v112
  %169 = vmatprep.subr.mxu0 0.0
  %170 = vmatpush1.msra.mxu0 %v113
  %171 = vmatprep.subr.mxu0 0.0
  %172 = vmatpush1.msra.mxu0 %v114
  %173 = vmatprep.subr.mxu0 0.0
  %174 = vmatpush1.msra.mxu0 %v115
  %175 = vmatprep.subr.mxu0 0.0
  %176 = vmatpush1.msra.mxu0 %v116
  %177 = vmatprep.subr.mxu0 0.0
  %178 = vmatpush1.msra.mxu0 %v117
  %179 = vmatprep.subr.mxu0 0.0
  %180 = vmatpush1.msra.mxu0 %v118
  %181 = vmatprep.subr.mxu0 0.0
  %182 = vmatpush1.msra.mxu0 %v119
  %183 = vmatprep.subr.mxu0 0.0
  %184 = vmatpush1.msra.mxu0 %v120
  %185 = vmatprep.subr.mxu0 0.0
  %186 = vmatpush1.msra.mxu0 %v121
  %187 = vmatprep.subr.mxu0 0.0
  %188 = vmatpush1.msra.mxu0 %v122
  %189 = vmatprep.subr.mxu0 0.0
  %190 = vmatpush1.msra.mxu0 %v123
  %191 = vmatprep.subr.mxu0 0.0
  %192 = vmatpush1.msra.mxu0 %v124
  %193 = vmatprep.subr.mxu0 0.0
  %194 = vmatpush1.msra.mxu0 %v125
  %195 = vmatprep.subr.mxu0 0.0
  %196 = vmatpush1.msra.mxu0 %v126
  %197 = vmatprep.subr.mxu0 0.0
  %198 = vmatpush1.msra.mxu0 %v127
  %199 = vmatprep.subr.mxu0 0.0
  %200 = vmatpush1.msra.mxu0 %v128
  %201 = vmatprep.subr.mxu0 0.0
  %202 = vmatpush1.msra.mxu0 %v129
  %203 = vmatprep.subr.mxu0 0.0
  %204 = vmatpush1.msra.mxu0 %v130
  %205 = vmatprep.subr.mxu0 0.0
  %206 = vmatpush1.msra.mxu0 %v131
  %207 = vmatprep.subr.mxu0 0.0
  %208 = vmatpush1.msra.mxu0 %v132
  %209 = vmatprep.subr.mxu0 0.0
  %210 = vmatpush1.msra.mxu0 %v133
  %211 = vmatprep.subr.mxu0 0.0
  %212 = vmatpush1.msra.mxu0 %v134
  %213 = vmatprep.subr.mxu0 0.0
  %214 = vmatpush1.msra.mxu0 %v135
  %215 = vmatprep.subr.mxu0 0.0
  %216 = vmatpush1.msra.mxu0 %v136
  %217 = vmatprep.mubr.f32.mxu0 %v78
  %218 = vmatmul.mubr.f32.gmra.mrb[0].mxu0 %v67
  %v219 = vpop.f32.mrb[0].mxu0
  %v220 = vadd.f32 0.0, %v219
  %v221 = vpop.f32.mrb[0].mxu0
  %222 = vmatprep.mubr.f32.mxu0 %v80
  %223 = vmatmul.mubr.f32.gmra.mrb[0].mxu0 %v57
  %v224 = vpop.f32.mrb[0].mxu0
  %v225 = vadd.f32 0.0, %v224
  %v226 = vpop.f32.mrb[0].mxu0
  %227 = vmatprep.mubr.f32.mxu0 %v83
  %228 = vmatmul.mubr.f32.gmra.mrb[0].mxu0 %v68
  %v229 = vpop.f32.mrb[0].mxu0
  %v230 = vadd.f32 0.0, %v229
  %v231 = vpop.f32.mrb[0].mxu0
  %232 = vmatprep.mubr.f32.mxu0 %v85
  %233 = vmatmul.mubr.f32.gmra.mrb[0].mxu0 %v60
  %v234 = vpop.f32.mrb[0].mxu0
  %v235 = vadd.f32 0.0, %v234
  %v236 = vpop.f32.mrb[0].mxu0
  %237 = vdwg.mxu0
  %238 = vmatprep.subr.mxu0 0.0
  %239 = vmatpush1.msra.mxu0 %v137
  %240 = vmatprep.subr.mxu0 0.0
  %241 = vmatpush1.msra.mxu0 %v138
  %242 = vmatprep.subr.mxu0 0.0
  %243 = vmatpush1.msra.mxu0 %v139
  %244 = vmatprep.subr.mxu0 0.0
  %245 = vmatpush1.msra.mxu0 %v140
  %246 = vmatprep.subr.mxu0 0.0
  %247 = vmatpush1.msra.mxu0 %v141
  %248 = vmatprep.subr.mxu0 0.0
  %249 = vmatpush1.msra.mxu0 %v142
  %250 = vmatprep.subr.mxu0 0.0
  %251 = vmatpush1.msra.mxu0 %v143
  %252 = vmatprep.subr.mxu0 0.0
  %253 = vmatpush1.msra.mxu0 %v144
  %254 = vmatprep.subr.mxu0 0.0
  %255 = vmatpush1.msra.mxu0 %v145
  %256 = vmatprep.subr.mxu0 0.0
  %257 = vmatpush1.msra.mxu0 %v146
  %258 = vmatprep.subr.mxu0 0.0
  %259 = vmatpush1.msra.mxu0 %v147
  %260 = vmatprep.subr.mxu0 0.0
  %261 = vmatpush1.msra.mxu0 %v148
  %262 = vmatprep.subr.mxu0 0.0
  %263 = vmatpush1.msra.mxu0 %v149
  %264 = vmatprep.subr.mxu0 0.0
  %265 = vmatpush1.msra.mxu0 %v150
  %266 = vmatprep.subr.mxu0 0.0
  %267 = vmatpush1.msra.mxu0 %v151
  %268 = vmatprep.subr.mxu0 0.0
  %269 = vmatpush1.msra.mxu0 %v152
  %270 = vmatprep.subr.mxu0 0.0
  %271 = vmatpush1.msra.mxu0 0.0
  %272 = vmatprep.subr.mxu0 0.0
  %273 = vmatpush1.msra.mxu0 0.0
  %274 = vmatprep.subr.mxu0 0.0
  %275 = vmatpush1.msra.mxu0 0.0
  %276 = vmatprep.subr.mxu0 0.0
  %277 = vmatpush1.msra.mxu0 0.0
  %278 = vmatprep.subr.mxu0 0.0
  %279 = vmatpush1.msra.mxu0 0.0
  %280 = vmatprep.subr.mxu0 0.0
  %281 = vmatpush1.msra.mxu0 0.0
  %282 = vmatprep.subr.mxu0 0.0
  %283 = vmatpush1.msra.mxu0 0.0
  %284 = vmatprep.subr.mxu0 0.0
  %285 = vmatpush1.msra.mxu0 0.0
  %286 = vmatprep.subr.mxu0 0.0
  %287 = vmatpush1.msra.mxu0 0.0
  %288 = vmatprep.subr.mxu0 0.0
  %289 = vmatpush1.msra.mxu0 0.0
  %290 = vmatprep.subr.mxu0 0.0
  %291 = vmatpush1.msra.mxu0 0.0
  %292 = vmatprep.subr.mxu0 0.0
  %293 = vmatpush1.msra.mxu0 0.0
  %294 = vmatprep.subr.mxu0 0.0
  %295 = vmatpush1.msra.mxu0 0.0
  %296 = vmatprep.subr.mxu0 0.0
  %297 = vmatpush1.msra.mxu0 0.0
  %298 = vmatprep.subr.mxu0 0.0
  %299 = vmatpush1.msra.mxu0 0.0
  %300 = vmatprep.subr.mxu0 0.0
  %301 = vmatpush1.msra.mxu0 0.0
  %302 = vmatprep.mubr.f32.mxu0 0.0
  %303 = vmatmul.mubr.f32.gmra.mrb[0].mxu0 %v93
  %v304 = vpop.f32.mrb[0].mxu0
  %v305 = vadd.f32 %v220, %v304
  %v306 = vpop.f32.mrb[0].mxu0
  %307 = vmatprep.mubr.f32.mxu0 0.0
  %308 = vmatmul.mubr.f32.gmra.mrb[0].mxu0 %v95
  %v309 = vpop.f32.mrb[0].mxu0
  %v310 = vadd.f32 %v225, %v309
  %v311 = vpop.f32.mrb[0].mxu0
  %312 = vmatprep.mubr.f32.mxu0 0.0
  %313 = vmatmul.mubr.f32.gmra.mrb[0].mxu0 %v98
  %v314 = vpop.f32.mrb[0].mxu0
  %v315 = vadd.f32 %v230, %v314
  %v316 = vpop.f32.mrb[0].mxu0
  %317 = vmatprep.mubr.f32.mxu0 0.0
  %318 = vmatmul.mubr.f32.gmra.mrb[0].mxu0 %v100
  %v319 = vpop.f32.mrb[0].mxu0
  %v320 = vadd.f32 %v235, %v319
  %v321 = vpop.f32.mrb[0].mxu0
  %322 = vdwg.mxu0
  %v323 = vld [vmem:[%s1] sm:$0xff]
  %v324 = vld [vmem:[%s1 + $0x8] sm:$0xff]
  %v325 = vld [vmem:[%s1 + $0x10] sm:$0xff]
  %v326 = vld [vmem:[%s1 + $0x18] sm:$0xff]
  %v327 = vadd.f32 %v305, %v323
  %v328 = vadd.f32 %v310, %v324
  %v329 = vadd.f32 %v315, %v325
  %v330 = vadd.f32 %v320, %v326
  %331 = vst [vmem:[%s5] sm:$0xff] %v327
  %332 = vst [vmem:[%s5 + $0x8] sm:$0xff] %v328
  %333 = vst [vmem:[%s5 + $0x10] sm:$0xff] %v329
  %334 = vst [vmem:[%s5 + $0x18] sm:$0xff] %v330
  // Predicated region
  $region22: #{preact_block.3} parent=0 // pred_check
    _
  $region23: #{preact_block.3} parent=0 // pred_check_branch
    %336 = sbr.rel (0) target = $region25
  $region24: #{preact_block.3} parent=0 // pred_region
    _
  $region25: #{preact_block.3} parent=0 // pred_fallthru
    _
  // Predicated region
  $region26: #{preact_block.3} parent=0 // pred_check
    _
  $region27: #{preact_block.3} parent=0 // pred_check_branch
    %338 = sbr.rel (0) target = $region29
  $region28: #{preact_block.3} parent=0 // pred_region
    _
  $region29: #{preact_block.3} parent=0 // pred_fallthru
    _

</llo_original>
